<compile_context>
chip_gen: v7x
topology: tpu7x:2x2x1
jax: 0.10.0
libtpu: 0.0.40
codegen_flags: <defaults>
</compile_context>

<pallas_src>
import functools

import jax
import jax.numpy as jnp
from jax.experimental import pallas as pl
from jax.experimental.pallas import tpu as pltpu


def _round_up(a, m):
    return (a + m - 1) // m * m


def _choose_tile_cols(hw_pad128, batch):
    """Largest lane-dense tile in {1024,512,256,128} that divides the 128-padded HW
    while keeping >= 2 parallel grid units (v7x megacore)."""
    for cand in (1024, 512, 256, 128):
        if cand <= hw_pad128 and hw_pad128 % cand == 0 and batch * (hw_pad128 // cand) >= 2:
            return cand
    return 128


def _make_fcomb_kernel(n_layers, compute_dtype=jnp.bfloat16):
    """Chain of 1x1 convs as channels-first matmuls; ReLU after all but the last.

    Ref order: x, bias0_eff, w0_feat, (w_i, b_i) for i=1..n_layers-1, out.
      x          : (1, C, Tc)        bf16  (feature pixels for one batch / col tile)
      bias0_eff  : (1, F0, 1)        f32   (layer-0 bias with z-contribution folded in)
      w0_feat    : (F0, C)           bf16
      w_i        : (Cout_i, Cin_i)   bf16  (last layer Cout padded to a multiple of 8)
      b_i        : (Cout_i, 1)       f32
      out        : (1, Cout_last, Tc)
    """

    def kernel(x_ref, b0_ref, w0_ref, *rest):
        o_ref = rest[-1]
        wb_refs = rest[:-1]                      # alternating (w, b) for layers 1..n-1

        x = x_ref[0]                             # (C, Tc) bf16 — already half-width
        # Layer 0: feature part on the MXU; z part already folded into b0_eff.
        h = jnp.dot(w0_ref[...], x, preferred_element_type=jnp.float32)   # (F0, Tc) f32
        h = h + b0_ref[0]                        # (F0, 1) broadcast over lanes
        h = jnp.maximum(h, 0.0)

        for li in range(n_layers - 1):
            w = wb_refs[2 * li][...]             # (Cout, Cin) bf16
            b = wb_refs[2 * li + 1][...]         # (Cout, 1)   f32
            h = jnp.dot(w, h.astype(compute_dtype),
                        preferred_element_type=jnp.float32) + b
            if li < n_layers - 2:                # ReLU after every conv except the last
                h = jnp.maximum(h, 0.0)

        o_ref[...] = h[None].astype(o_ref.dtype)

    return kernel


@functools.partial(jax.jit, static_argnames=("num_classes", "tile_cols"))
def fcomb_forward(feature_map, z, weights, biases, *, num_classes, tile_cols=None):
    """Fcomb.forward with use_tile=True, norm=False.

    feature_map: (B, C, H, W) float32  (NCHW, like the PyTorch module)
    z:           (B, L)       float32
    weights:     list of (Cout_i, Cin_i) matrices (PyTorch 1x1-conv weights, squeezed)
    biases:      list of (Cout_i,) vectors
    returns:     (B, num_classes, H, W) float32
    """
    B, C, H, W = feature_map.shape
    n_layers = len(weights)
    F0 = weights[0].shape[0]

    HW = H * W
    hw128 = _round_up(HW, 128)
    if tile_cols is not None:
        # Validate user tile: lane-dense multiple of 128.
        tc = max(128, _round_up(int(tile_cols), 128))
        HW_pad = _round_up(HW, tc)
    else:
        tc = _choose_tile_cols(hw128, B)
        HW_pad = hw128

    # bf16 feature-pixel stream (kernel feeds the MXU in bf16 anyway); the pad runs
    # on the half-width copy. NCHW -> (B, C, H*W) is a free reshape (no transpose).
    x_cf = feature_map.reshape(B, C, HW).astype(jnp.bfloat16)
    if HW_pad != HW:
        x_cf = jnp.pad(x_cf, ((0, 0), (0, 0), (0, HW_pad - HW)))

    # Split layer-0 weight into feature part and z part; fold z into a per-batch bias.
    w0 = weights[0]                              # (F0, C + L)
    w0_f = w0[:, :C].astype(jnp.bfloat16)        # (F0, C)
    w0_z = w0[:, C:]                             # (F0, L)
    bias0_eff = (z @ w0_z.T + biases[0][None, :]).astype(jnp.float32)   # (B, F0)
    bias0_eff = bias0_eff.reshape(B, F0, 1)

    # Pad the final layer's output channels to a multiple of 8 (sublane-dense output
    # block, unmasked stores); the extra zero rows are sliced off after the kernel.
    out_C = max(8, _round_up(num_classes, 8))
    w_last = weights[-1]
    b_last = biases[-1]
    if out_C != num_classes:
        w_last = jnp.concatenate(
            [w_last, jnp.zeros((out_C - num_classes, w_last.shape[1]), w_last.dtype)],
            axis=0)
        b_last = jnp.concatenate(
            [b_last, jnp.zeros((out_C - num_classes,), b_last.dtype)], axis=0)
    tail_weights = list(weights[1:-1]) + [w_last]
    tail_biases = list(biases[1:-1]) + [b_last]

    kernel = _make_fcomb_kernel(n_layers)

    in_specs = [
        pl.BlockSpec((1, C, tc), lambda b, c: (b, 0, c)),       # bf16 feature pixels
        pl.BlockSpec((1, F0, 1), lambda b, c: (b, 0, 0)),       # per-batch eff. bias
        pl.BlockSpec(w0_f.shape, lambda b, c: (0, 0)),          # resident weight
    ]
    operands = [x_cf, bias0_eff, w0_f]
    for w, bvec in zip(tail_weights, tail_biases):
        wb = w.astype(jnp.bfloat16)
        bb = bvec.reshape(-1, 1).astype(jnp.float32)
        in_specs.append(pl.BlockSpec(wb.shape, lambda b, c: (0, 0)))
        in_specs.append(pl.BlockSpec(bb.shape, lambda b, c: (0, 0)))
        operands.append(wb)
        operands.append(bb)

    # Advisory cost estimate so XLA schedules the custom call sensibly.
    per_pixel_macs = F0 * C + sum(int(w.shape[0]) * int(w.shape[1]) for w in tail_weights)
    flops = 2 * B * HW_pad * per_pixel_macs
    bytes_accessed = (B * HW_pad * (C * 2 + out_C * 4)            # x bf16 in, out f32
                      + 2 * (int(w0_f.size) + sum(int(w.size) for w in tail_weights))
                      + 4 * (int(bias0_eff.size) + sum(int(b.size) for b in tail_biases)))

    out = pl.pallas_call(
        kernel,
        out_shape=jax.ShapeDtypeStruct((B, out_C, HW_pad), feature_map.dtype),
        grid_spec=pltpu.PrefetchScalarGridSpec(
            num_scalar_prefetch=0,
            grid=(B, HW_pad // tc),
            in_specs=in_specs,
            out_specs=pl.BlockSpec((1, out_C, tc), lambda b, c: (b, 0, c)),
        ),
        compiler_params=pltpu.CompilerParams(
            dimension_semantics=("parallel", "parallel"),
        ),
        cost_estimate=pl.CostEstimate(
            flops=int(flops), transcendentals=0, bytes_accessed=int(bytes_accessed)),
    )(*operands)

    out = out[:, :num_classes, :HW]               # drop channel + spatial padding
    return out.reshape(B, num_classes, H, W)      # free reshape back to NCHW


def _reference(feature_map, z, weights, biases):
    """Pure-JAX f32 reference of the same math (concat + chain of 1x1 convs)."""
    B, C, H, W = feature_map.shape
    L = z.shape[1]
    z_b = jnp.broadcast_to(z[:, :, None, None], (B, L, H, W))
    h = jnp.concatenate([feature_map, z_b], axis=1)              # (B, C+L, H, W)
    n = len(weights)
    for i, (w, b) in enumerate(zip(weights, biases)):
        h = jnp.einsum("oc,bchw->bohw", w, h) + b[None, :, None, None]
        if i < n - 1:
            h = jnp.maximum(h, 0.0)
    return h


if __name__ == "__main__":
    # Small shapes consistent with the module's forward.
    B, H, W = 2, 16, 16
    num_filters = [32, 64, 128, 192]   # num_filters[0] is what Fcomb uses
    latent_dim = 8
    num_classes = 4
    no_convs_fcomb = 4                 # -> 3 convs (+ReLU) in self.layers, + last_layer

    F0 = num_filters[0]
    # Channel dims of the 1x1-conv chain:
    dims = [F0 + latent_dim] + [F0] * (no_convs_fcomb - 1) + [num_classes]

    key = jax.random.PRNGKey(0)
    k_feat, k_z, k_par = jax.random.split(key, 3)

    feature_map = jax.random.normal(k_feat, (B, F0, H, W), dtype=jnp.float32)
    z = jax.random.normal(k_z, (B, latent_dim), dtype=jnp.float32)

    # Deterministic synthetic parameters, PyTorch conv layout (Cout, Cin) + (Cout,).
    weights, biases = [], []
    pkeys = jax.random.split(k_par, 2 * (len(dims) - 1))
    for li in range(len(dims) - 1):
        cin, cout = dims[li], dims[li + 1]
        w = jax.random.normal(pkeys[2 * li], (cout, cin), dtype=jnp.float32) * 0.05
        b = jax.random.normal(pkeys[2 * li + 1], (cout,), dtype=jnp.float32) * 0.01
        weights.append(w)
        biases.append(b)

    out = fcomb_forward(feature_map, z, weights, biases, num_classes=num_classes)
    out = jax.block_until_ready(out)

    ref = _reference(feature_map, z, weights, biases)
    assert out.shape == (B, num_classes, H, W)
    # bf16 MXU inputs with f32 accumulation -> loosened tolerance vs. pure-f32 reference.
    assert jnp.allclose(out, ref, atol=1e-2, rtol=1e-2), "mismatch vs reference"

    print("KERNEL_OK")
</pallas_src>

<mosaic_0001>
module attributes {stable_mosaic.version = 11 : i64} {
  func.func @kernel(%arg0: i32, %arg1: i32, %arg2: memref<1x32x256xbf16, #tpu.memory_space<vmem>>, %arg3: memref<1x32x1xf32, #tpu.memory_space<vmem>>, %arg4: memref<32x32xbf16, #tpu.memory_space<vmem>>, %arg5: memref<32x32xbf16, #tpu.memory_space<vmem>>, %arg6: memref<32x1xf32, #tpu.memory_space<vmem>>, %arg7: memref<32x32xbf16, #tpu.memory_space<vmem>>, %arg8: memref<32x1xf32, #tpu.memory_space<vmem>>, %arg9: memref<8x32xbf16, #tpu.memory_space<vmem>>, %arg10: memref<8x1xf32, #tpu.memory_space<vmem>>, %arg11: memref<1x8x256xf32, #tpu.memory_space<vmem>>) attributes {dimension_semantics = [#tpu.dimension_semantics<parallel>, #tpu.dimension_semantics<parallel>], iteration_bounds = array<i64: 2, 1>, scalar_prefetch = 0 : i64, scratch_operands = 0 : i64, tpu.core_type = #tpu.core_type<tc>, window_params = [{transform_indices = @transform_0, window_bounds = array<i64: 1, 32, 256>}, {transform_indices = @transform_1, window_bounds = array<i64: 1, 32, 1>}, {pipeline_mode = #tpu.pipeline_mode<synchronous>, transform_indices = @transform_2, window_bounds = array<i64: 32, 32>}, {pipeline_mode = #tpu.pipeline_mode<synchronous>, transform_indices = @transform_3, window_bounds = array<i64: 32, 32>}, {pipeline_mode = #tpu.pipeline_mode<synchronous>, transform_indices = @transform_4, window_bounds = array<i64: 32, 1>}, {pipeline_mode = #tpu.pipeline_mode<synchronous>, transform_indices = @transform_5, window_bounds = array<i64: 32, 32>}, {pipeline_mode = #tpu.pipeline_mode<synchronous>, transform_indices = @transform_6, window_bounds = array<i64: 32, 1>}, {pipeline_mode = #tpu.pipeline_mode<synchronous>, transform_indices = @transform_7, window_bounds = array<i64: 8, 32>}, {pipeline_mode = #tpu.pipeline_mode<synchronous>, transform_indices = @transform_8, window_bounds = array<i64: 8, 1>}, {transform_indices = @transform_9, window_bounds = array<i64: 1, 8, 256>}]} {
    %c0 = arith.constant 0 : index
    %c0_0 = arith.constant 0 : index
    %c0_1 = arith.constant 0 : index
    %0 = vector.load %arg2[%c0, %c0_0, %c0_1] : memref<1x32x256xbf16, #tpu.memory_space<vmem>>, vector<1x32x256xbf16>
    %1 = vector.shape_cast %0 : vector<1x32x256xbf16> to vector<32x256xbf16>
    %c0_2 = arith.constant 0 : index
    %c0_3 = arith.constant 0 : index
    %2 = vector.load %arg4[%c0_2, %c0_3] : memref<32x32xbf16, #tpu.memory_space<vmem>>, vector<32x32xbf16>
    %cst = arith.constant dense<0.000000e+00> : vector<32x256xf32>
    %3 = tpu.matmul %2, %1, %cst {dimension_numbers = #tpu.dot_dimension_numbers<[1], [0], [0], [1], [0, 0, 1, 1], [], []>} : vector<32x32xbf16>, vector<32x256xbf16>, vector<32x256xf32> -> vector<32x256xf32>
    %c0_4 = arith.constant 0 : index
    %c0_5 = arith.constant 0 : index
    %c0_6 = arith.constant 0 : index
    %4 = vector.load %arg3[%c0_4, %c0_5, %c0_6] : memref<1x32x1xf32, #tpu.memory_space<vmem>>, vector<1x32x1xf32>
    %5 = vector.shape_cast %4 : vector<1x32x1xf32> to vector<32x1xf32>
    %6 = vector.broadcast %5 : vector<32x1xf32> to vector<32x256xf32>
    %7 = arith.addf %3, %6 : vector<32x256xf32>
    %cst_7 = arith.constant 0.000000e+00 : f32
    %8 = vector.broadcast %cst_7 : f32 to vector<32x256xf32>
    %9 = arith.maximumf %7, %8 : vector<32x256xf32>
    %c0_8 = arith.constant 0 : index
    %c0_9 = arith.constant 0 : index
    %10 = vector.load %arg5[%c0_8, %c0_9] : memref<32x32xbf16, #tpu.memory_space<vmem>>, vector<32x32xbf16>
    %c0_10 = arith.constant 0 : index
    %c0_11 = arith.constant 0 : index
    %11 = vector.load %arg6[%c0_10, %c0_11] : memref<32x1xf32, #tpu.memory_space<vmem>>, vector<32x1xf32>
    %12 = arith.truncf %9 : vector<32x256xf32> to vector<32x256xbf16>
    %cst_12 = arith.constant dense<0.000000e+00> : vector<32x256xf32>
    %13 = tpu.matmul %10, %12, %cst_12 {dimension_numbers = #tpu.dot_dimension_numbers<[1], [0], [0], [1], [0, 0, 1, 1], [], []>} : vector<32x32xbf16>, vector<32x256xbf16>, vector<32x256xf32> -> vector<32x256xf32>
    %14 = vector.broadcast %11 : vector<32x1xf32> to vector<32x256xf32>
    %15 = arith.addf %13, %14 : vector<32x256xf32>
    %cst_13 = arith.constant 0.000000e+00 : f32
    %16 = vector.broadcast %cst_13 : f32 to vector<32x256xf32>
    %17 = arith.maximumf %15, %16 : vector<32x256xf32>
    %c0_14 = arith.constant 0 : index
    %c0_15 = arith.constant 0 : index
    %18 = vector.load %arg7[%c0_14, %c0_15] : memref<32x32xbf16, #tpu.memory_space<vmem>>, vector<32x32xbf16>
    %c0_16 = arith.constant 0 : index
    %c0_17 = arith.constant 0 : index
    %19 = vector.load %arg8[%c0_16, %c0_17] : memref<32x1xf32, #tpu.memory_space<vmem>>, vector<32x1xf32>
    %20 = arith.truncf %17 : vector<32x256xf32> to vector<32x256xbf16>
    %cst_18 = arith.constant dense<0.000000e+00> : vector<32x256xf32>
    %21 = tpu.matmul %18, %20, %cst_18 {dimension_numbers = #tpu.dot_dimension_numbers<[1], [0], [0], [1], [0, 0, 1, 1], [], []>} : vector<32x32xbf16>, vector<32x256xbf16>, vector<32x256xf32> -> vector<32x256xf32>
    %22 = vector.broadcast %19 : vector<32x1xf32> to vector<32x256xf32>
    %23 = arith.addf %21, %22 : vector<32x256xf32>
    %cst_19 = arith.constant 0.000000e+00 : f32
    %24 = vector.broadcast %cst_19 : f32 to vector<32x256xf32>
    %25 = arith.maximumf %23, %24 : vector<32x256xf32>
    %c0_20 = arith.constant 0 : index
    %c0_21 = arith.constant 0 : index
    %26 = vector.load %arg9[%c0_20, %c0_21] : memref<8x32xbf16, #tpu.memory_space<vmem>>, vector<8x32xbf16>
    %c0_22 = arith.constant 0 : index
    %c0_23 = arith.constant 0 : index
    %27 = vector.load %arg10[%c0_22, %c0_23] : memref<8x1xf32, #tpu.memory_space<vmem>>, vector<8x1xf32>
    %28 = arith.truncf %25 : vector<32x256xf32> to vector<32x256xbf16>
    %cst_24 = arith.constant dense<0.000000e+00> : vector<8x256xf32>
    %29 = tpu.matmul %26, %28, %cst_24 {dimension_numbers = #tpu.dot_dimension_numbers<[1], [0], [0], [1], [0, 0, 1, 1], [], []>} : vector<8x32xbf16>, vector<32x256xbf16>, vector<8x256xf32> -> vector<8x256xf32>
    %30 = vector.broadcast %27 : vector<8x1xf32> to vector<8x256xf32>
    %31 = arith.addf %29, %30 : vector<8x256xf32>
    %32 = vector.shape_cast %31 : vector<8x256xf32> to vector<1x8x256xf32>
    %c0_25 = arith.constant 0 : index
    %c0_26 = arith.constant 0 : index
    %c0_27 = arith.constant 0 : index
    %33 = vector.load %arg11[%c0_25, %c0_26, %c0_27] : memref<1x8x256xf32, #tpu.memory_space<vmem>>, vector<1x8x256xf32>
    tpu.vector_store %arg11[%c0_25, %c0_26, %c0_27], %32 {strides = array<i32>} : memref<1x8x256xf32, #tpu.memory_space<vmem>>, vector<1x8x256xf32>,
    return
  }
  func.func @transform_0(%arg0: i32, %arg1: i32) -> (i32, i32, i32) {
    %c0_i32 = arith.constant 0 : i32
    %c0_i32_0 = arith.constant 0 : i32
    return %arg0, %c0_i32, %arg1 : i32, i32, i32
  }
  func.func @transform_1(%arg0: i32, %arg1: i32) -> (i32, i32, i32) {
    %c0_i32 = arith.constant 0 : i32
    %c0_i32_0 = arith.constant 0 : i32
    %c0_i32_1 = arith.constant 0 : i32
    return %arg0, %c0_i32, %c0_i32_0 : i32, i32, i32
  }
  func.func @transform_2(%arg0: i32, %arg1: i32) -> (i32, i32) {
    %c0_i32 = arith.constant 0 : i32
    %c0_i32_0 = arith.constant 0 : i32
    %c0_i32_1 = arith.constant 0 : i32
    return %c0_i32, %c0_i32_0 : i32, i32
  }
  func.func @transform_3(%arg0: i32, %arg1: i32) -> (i32, i32) {
    %c0_i32 = arith.constant 0 : i32
    %c0_i32_0 = arith.constant 0 : i32
    %c0_i32_1 = arith.constant 0 : i32
    return %c0_i32, %c0_i32_0 : i32, i32
  }
  func.func @transform_4(%arg0: i32, %arg1: i32) -> (i32, i32) {
    %c0_i32 = arith.constant 0 : i32
    %c0_i32_0 = arith.constant 0 : i32
    %c0_i32_1 = arith.constant 0 : i32
    return %c0_i32, %c0_i32_0 : i32, i32
  }
  func.func @transform_5(%arg0: i32, %arg1: i32) -> (i32, i32) {
    %c0_i32 = arith.constant 0 : i32
    %c0_i32_0 = arith.constant 0 : i32
    %c0_i32_1 = arith.constant 0 : i32
    return %c0_i32, %c0_i32_0 : i32, i32
  }
  func.func @transform_6(%arg0: i32, %arg1: i32) -> (i32, i32) {
    %c0_i32 = arith.constant 0 : i32
    %c0_i32_0 = arith.constant 0 : i32
    %c0_i32_1 = arith.constant 0 : i32
    return %c0_i32, %c0_i32_0 : i32, i32
  }
  func.func @transform_7(%arg0: i32, %arg1: i32) -> (i32, i32) {
    %c0_i32 = arith.constant 0 : i32
    %c0_i32_0 = arith.constant 0 : i32
    %c0_i32_1 = arith.constant 0 : i32
    return %c0_i32, %c0_i32_0 : i32, i32
  }
  func.func @transform_8(%arg0: i32, %arg1: i32) -> (i32, i32) {
    %c0_i32 = arith.constant 0 : i32
    %c0_i32_0 = arith.constant 0 : i32
    %c0_i32_1 = arith.constant 0 : i32
    return %c0_i32, %c0_i32_0 : i32, i32
  }
  func.func @transform_9(%arg0: i32, %arg1: i32) -> (i32, i32, i32) {
    %c0_i32 = arith.constant 0 : i32
    %c0_i32_0 = arith.constant 0 : i32
    return %arg0, %c0_i32, %arg1 : i32, i32, i32
  }
}

</mosaic_0001>

<llo_original>
// kernel: fcomb_forward.1
$region0: #{fcomb_forward.1}
  #allocation0 [shape = 'u32[]', space=smem, size = 0x4, offset = 0x4, fixed_abs, tag = 'smem constant byte address 0x4 - core index']
  #allocation1 [shape = 'u32[144,128]{1,0:T(1,128)}', space=vmem, size = 0x12000, scoped, tag = 'internal scratch']
  %s0 = inlined_call_operand.vmem [shape: bf16[2,32,256], index: 0, kind: input, shape index: {}]
  %s1 = inlined_call_operand.vmem [shape: f32[2,32,1], index: 1, kind: input, shape index: {}]
  %s2 = inlined_call_operand.vmem [shape: bf16[32,32], index: 2, kind: input, shape index: {}]
  %s3 = inlined_call_operand.vmem [shape: bf16[32,32], index: 3, kind: input, shape index: {}]
  %s4 = inlined_call_operand.vmem [shape: f32[32,1], index: 4, kind: input, shape index: {}]
  %s5 = inlined_call_operand.vmem [shape: bf16[32,32], index: 5, kind: input, shape index: {}]
  %s6 = inlined_call_operand.vmem [shape: f32[32,1], index: 6, kind: input, shape index: {}]
  %s7 = inlined_call_operand.vmem [shape: bf16[8,32], index: 7, kind: input, shape index: {}]
  %s8 = inlined_call_operand.vmem [shape: f32[8,1], index: 8, kind: input, shape index: {}]
  %s9 = inlined_call_operand.vmem [shape: f32[2,8,256], index: 9, kind: output, shape index: {}]
  %s10 = sld [smem:[#allocation0]]
  $region69: #{fcomb_forward.1} parent=0
    _
  %s12 = ssub.s32 1, %s10
  %s13 = scalar_select 0, %s12, %s10
  loop: start=0, step=1, limit=4
  $region2: #{fcomb_forward.1} parent=0 // loop_pre_header
    _
  $region3: #{fcomb_forward.1} parent=0 // loop_header
    %s15 = sphi 0, %s19
    %p16 = scmp.ge.s32.totalorder %s15, 4
    %s22 = sphi 0, %s34
    %s23 = sphi 0, %s30
    %s24 = sphi 0, %s22
    %s25 = sphi 0, %s23
    %s26 = sphi 0, %s24
    %s27 = sphi 0, %s25
    %s39 = sphi 0, %s41
    %s42 = sphi 0, %s39
    %s43 = sphi 0, %s42
    %s59 = sphi 0, %s43
    %s65 = sphi 0, %s67
    %s68 = sphi 0, %s65
    %s69 = sphi 0, %s68
    %s85 = sphi 0, %s69
    %s89 = sphi 0, %s89
    %s91 = sphi 0, %s89
    %s92 = sphi 0, %s91
    %s106 = sphi 0, %s92
    %s110 = sphi 0, %s110
    %s112 = sphi 0, %s110
    %s113 = sphi 0, %s112
    %s127 = sphi 0, %s113
    %s131 = sphi 0, %s131
    %s133 = sphi 0, %s131
    %s134 = sphi 0, %s133
    %s148 = sphi 0, %s134
    %s152 = sphi 0, %s152
    %s154 = sphi 0, %s152
    %s155 = sphi 0, %s154
    %s169 = sphi 0, %s155
    %s173 = sphi 0, %s173
    %s175 = sphi 0, %s173
    %s176 = sphi 0, %s175
    %s190 = sphi 0, %s176
    %s194 = sphi 0, %s194
    %s196 = sphi 0, %s194
    %s197 = sphi 0, %s196
    %s211 = sphi 0, %s197
    %s215 = sphi 0, %s215
    %s217 = sphi 0, %s215
    %s218 = sphi 0, %s217
    %s232 = sphi 0, %s218
    %s240 = sphi 0, %s242
    %s243 = sphi 0, %s240
    %s244 = sphi 0, %s243
    %s260 = sphi 0, %s244
  $region4: #{fcomb_forward.1} parent=0 // loop_header_branch
    %18 = sbr.rel (%p16) target = $region8
  $region5: #{fcomb_forward.1} parent=0 // loop_body
    %s20 = ssub.s32 %s15, 1
    %s21 = ssub.s32 %s15, 2
    %s28 = sadd.s32 1, %s23
    %p29 = scmp.ge.s32.totalorder %s28, 1
    %s30 = scalar_select %p29, 0, %s28
    %s31 = sadd.s32 1, %s22
    %s32 = scalar_select %p29, %s31, %s22
    %p33 = scmp.ge.s32.totalorder %s32, 2
    %s34 = scalar_select %p33, 0, %s32
    %s35 = ssub.s32 %s22, %s34
    %s36 = ssub.s32 %s23, %s30
    %s37 = sor.u32 %s35, %s36
    %p38 = scmp.eq.s32.totalorder %s37, 0
    %s40 = sadd.s32 %s39, 1
    %s41 = scalar_select %p38, %s39, %s40
    %p44 = pneg %p38
    %p45 = scmp.eq.s32.totalorder %s15, 1
    %p46 = por %p44, %p45
    %p47 = scmp.ne.s32.totalorder %s39, %s42
    %p48 = scmp.eq.s32.totalorder %s15, 0
    %p49 = por %p47, %p48
    %p50 = scmp.ne.s32.totalorder %s39, %s42
    %p51 = scmp.eq.s32.totalorder %s20, 1
    %p52 = por %p50, %p51
    %p53 = scmp.ne.s32.totalorder %s42, %s43
    %p54 = scmp.eq.s32.totalorder %s20, 0
    %p55 = por %p53, %p54
    %p56 = scmp.ne.s32.totalorder %s42, %s43
    %p57 = scmp.eq.s32.totalorder %s21, 1
    %p58 = por %p56, %p57
    %p60 = scmp.ne.s32.totalorder %s43, %s59
    %p61 = scmp.eq.s32.totalorder %s21, 0
    %p62 = por %p60, %p61
    %s63 = ssub.s32 %s22, %s34
    %p64 = scmp.eq.s32.totalorder %s63, 0
    %s66 = sadd.s32 %s65, 1
    %s67 = scalar_select %p64, %s65, %s66
    %p70 = pneg %p64
    %p71 = scmp.eq.s32.totalorder %s15, 1
    %p72 = por %p70, %p71
    %p73 = scmp.ne.s32.totalorder %s65, %s68
    %p74 = scmp.eq.s32.totalorder %s15, 0
    %p75 = por %p73, %p74
    %p76 = scmp.ne.s32.totalorder %s65, %s68
    %p77 = scmp.eq.s32.totalorder %s20, 1
    %p78 = por %p76, %p77
    %p79 = scmp.ne.s32.totalorder %s68, %s69
    %p80 = scmp.eq.s32.totalorder %s20, 0
    %p81 = por %p79, %p80
    %p82 = scmp.ne.s32.totalorder %s68, %s69
    %p83 = scmp.eq.s32.totalorder %s21, 1
    %p84 = por %p82, %p83
    %p86 = scmp.ne.s32.totalorder %s69, %s85
    %p87 = scmp.eq.s32.totalorder %s21, 0
    %p88 = por %p86, %p87
    %s90 = sadd.s32 %s89, 1
    %p93 = scmp.eq.s32.totalorder %s15, 1
    %p94 = scmp.ne.s32.totalorder %s89, %s91
    %p95 = scmp.eq.s32.totalorder %s15, 0
    %p96 = por %p94, %p95
    %p97 = scmp.ne.s32.totalorder %s89, %s91
    %p98 = scmp.eq.s32.totalorder %s20, 1
    %p99 = por %p97, %p98
    %p100 = scmp.ne.s32.totalorder %s91, %s92
    %p101 = scmp.eq.s32.totalorder %s20, 0
    %p102 = por %p100, %p101
    %p103 = scmp.ne.s32.totalorder %s91, %s92
    %p104 = scmp.eq.s32.totalorder %s21, 1
    %p105 = por %p103, %p104
    %p107 = scmp.ne.s32.totalorder %s92, %s106
    %p108 = scmp.eq.s32.totalorder %s21, 0
    %p109 = por %p107, %p108
    %s111 = sadd.s32 %s110, 1
    %p114 = scmp.eq.s32.totalorder %s15, 1
    %p115 = scmp.ne.s32.totalorder %s110, %s112
    %p116 = scmp.eq.s32.totalorder %s15, 0
    %p117 = por %p115, %p116
    %p118 = scmp.ne.s32.totalorder %s110, %s112
    %p119 = scmp.eq.s32.totalorder %s20, 1
    %p120 = por %p118, %p119
    %p121 = scmp.ne.s32.totalorder %s112, %s113
    %p122 = scmp.eq.s32.totalorder %s20, 0
    %p123 = por %p121, %p122
    %p124 = scmp.ne.s32.totalorder %s112, %s113
    %p125 = scmp.eq.s32.totalorder %s21, 1
    %p126 = por %p124, %p125
    %p128 = scmp.ne.s32.totalorder %s113, %s127
    %p129 = scmp.eq.s32.totalorder %s21, 0
    %p130 = por %p128, %p129
    %s132 = sadd.s32 %s131, 1
    %p135 = scmp.eq.s32.totalorder %s15, 1
    %p136 = scmp.ne.s32.totalorder %s131, %s133
    %p137 = scmp.eq.s32.totalorder %s15, 0
    %p138 = por %p136, %p137
    %p139 = scmp.ne.s32.totalorder %s131, %s133
    %p140 = scmp.eq.s32.totalorder %s20, 1
    %p141 = por %p139, %p140
    %p142 = scmp.ne.s32.totalorder %s133, %s134
    %p143 = scmp.eq.s32.totalorder %s20, 0
    %p144 = por %p142, %p143
    %p145 = scmp.ne.s32.totalorder %s133, %s134
    %p146 = scmp.eq.s32.totalorder %s21, 1
    %p147 = por %p145, %p146
    %p149 = scmp.ne.s32.totalorder %s134, %s148
    %p150 = scmp.eq.s32.totalorder %s21, 0
    %p151 = por %p149, %p150
    %s153 = sadd.s32 %s152, 1
    %p156 = scmp.eq.s32.totalorder %s15, 1
    %p157 = scmp.ne.s32.totalorder %s152, %s154
    %p158 = scmp.eq.s32.totalorder %s15, 0
    %p159 = por %p157, %p158
    %p160 = scmp.ne.s32.totalorder %s152, %s154
    %p161 = scmp.eq.s32.totalorder %s20, 1
    %p162 = por %p160, %p161
    %p163 = scmp.ne.s32.totalorder %s154, %s155
    %p164 = scmp.eq.s32.totalorder %s20, 0
    %p165 = por %p163, %p164
    %p166 = scmp.ne.s32.totalorder %s154, %s155
    %p167 = scmp.eq.s32.totalorder %s21, 1
    %p168 = por %p166, %p167
    %p170 = scmp.ne.s32.totalorder %s155, %s169
    %p171 = scmp.eq.s32.totalorder %s21, 0
    %p172 = por %p170, %p171
    %s174 = sadd.s32 %s173, 1
    %p177 = scmp.eq.s32.totalorder %s15, 1
    %p178 = scmp.ne.s32.totalorder %s173, %s175
    %p179 = scmp.eq.s32.totalorder %s15, 0
    %p180 = por %p178, %p179
    %p181 = scmp.ne.s32.totalorder %s173, %s175
    %p182 = scmp.eq.s32.totalorder %s20, 1
    %p183 = por %p181, %p182
    %p184 = scmp.ne.s32.totalorder %s175, %s176
    %p185 = scmp.eq.s32.totalorder %s20, 0
    %p186 = por %p184, %p185
    %p187 = scmp.ne.s32.totalorder %s175, %s176
    %p188 = scmp.eq.s32.totalorder %s21, 1
    %p189 = por %p187, %p188
    %p191 = scmp.ne.s32.totalorder %s176, %s190
    %p192 = scmp.eq.s32.totalorder %s21, 0
    %p193 = por %p191, %p192
    %s195 = sadd.s32 %s194, 1
    %p198 = scmp.eq.s32.totalorder %s15, 1
    %p199 = scmp.ne.s32.totalorder %s194, %s196
    %p200 = scmp.eq.s32.totalorder %s15, 0
    %p201 = por %p199, %p200
    %p202 = scmp.ne.s32.totalorder %s194, %s196
    %p203 = scmp.eq.s32.totalorder %s20, 1
    %p204 = por %p202, %p203
    %p205 = scmp.ne.s32.totalorder %s196, %s197
    %p206 = scmp.eq.s32.totalorder %s20, 0
    %p207 = por %p205, %p206
    %p208 = scmp.ne.s32.totalorder %s196, %s197
    %p209 = scmp.eq.s32.totalorder %s21, 1
    %p210 = por %p208, %p209
    %p212 = scmp.ne.s32.totalorder %s197, %s211
    %p213 = scmp.eq.s32.totalorder %s21, 0
    %p214 = por %p212, %p213
    %s216 = sadd.s32 %s215, 1
    %p219 = scmp.eq.s32.totalorder %s15, 1
    %p220 = scmp.ne.s32.totalorder %s215, %s217
    %p221 = scmp.eq.s32.totalorder %s15, 0
    %p222 = por %p220, %p221
    %p223 = scmp.ne.s32.totalorder %s215, %s217
    %p224 = scmp.eq.s32.totalorder %s20, 1
    %p225 = por %p223, %p224
    %p226 = scmp.ne.s32.totalorder %s217, %s218
    %p227 = scmp.eq.s32.totalorder %s20, 0
    %p228 = por %p226, %p227
    %p229 = scmp.ne.s32.totalorder %s217, %s218
    %p230 = scmp.eq.s32.totalorder %s21, 1
    %p231 = por %p229, %p230
    %p233 = scmp.ne.s32.totalorder %s218, %s232
    %p234 = scmp.eq.s32.totalorder %s21, 0
    %p235 = por %p233, %p234
    %s236 = ssub.s32 %s22, %s34
    %s237 = ssub.s32 %s23, %s30
    %s238 = sor.u32 %s236, %s237
    %p239 = scmp.eq.s32.totalorder %s238, 0
    %s241 = sadd.s32 %s240, 1
    %s242 = scalar_select %p239, %s240, %s241
    %p245 = pneg %p239
    %p246 = scmp.eq.s32.totalorder %s15, 1
    %p247 = por %p245, %p246
    %p248 = scmp.ne.s32.totalorder %s240, %s243
    %p249 = scmp.eq.s32.totalorder %s15, 0
    %p250 = por %p248, %p249
    %p251 = scmp.ne.s32.totalorder %s240, %s243
    %p252 = scmp.eq.s32.totalorder %s20, 1
    %p253 = por %p251, %p252
    %p254 = scmp.ne.s32.totalorder %s243, %s244
    %p255 = scmp.eq.s32.totalorder %s20, 0
    %p256 = por %p254, %p255
    %p257 = scmp.ne.s32.totalorder %s243, %s244
    %p258 = scmp.eq.s32.totalorder %s21, 1
    %p259 = por %p257, %p258
    %p261 = scmp.ne.s32.totalorder %s244, %s260
    %p262 = scmp.eq.s32.totalorder %s21, 0
    %p263 = por %p261, %p262
    %p264 = scmp.le.s32.totalorder 1, %s15
    %p265 = scmp.lt.s32.totalorder %s15, 3
    %p266 = pnand %p264, %p265
    %p267 = pneg %p266
    // Predicated region
    $region9: #{fcomb_forward.1} parent=5 // pred_check
      _
    $region10: #{fcomb_forward.1} parent=5 // pred_check_branch
      %269 = sbr.rel (%p266) target = $region12
    $region11: #{fcomb_forward.1} parent=5 // pred_region
      %s270 = ssub.s32 %s15, 1
      // Predicated region
      $region13: #{fcomb_forward.1} parent=11 // pred_check
        %p271 = pneg %p102
      $region14: #{fcomb_forward.1} parent=11 // pred_check_branch
        %273 = sbr.rel (%p271) target = $region16
      $region15: #{fcomb_forward.1} parent=11 // pred_region
        _
      $region16: #{fcomb_forward.1} parent=11 // pred_fallthru
        _
      // Predicated region
      $region17: #{fcomb_forward.1} parent=11 // pred_check
        %p274 = pneg %p123
      $region18: #{fcomb_forward.1} parent=11 // pred_check_branch
        %276 = sbr.rel (%p274) target = $region20
      $region19: #{fcomb_forward.1} parent=11 // pred_region
        _
      $region20: #{fcomb_forward.1} parent=11 // pred_fallthru
        _
      // Predicated region
      $region21: #{fcomb_forward.1} parent=11 // pred_check
        %p277 = pneg %p144
      $region22: #{fcomb_forward.1} parent=11 // pred_check_branch
        %279 = sbr.rel (%p277) target = $region24
      $region23: #{fcomb_forward.1} parent=11 // pred_region
        _
      $region24: #{fcomb_forward.1} parent=11 // pred_fallthru
        _
      // Predicated region
      $region25: #{fcomb_forward.1} parent=11 // pred_check
        %p280 = pneg %p165
      $region26: #{fcomb_forward.1} parent=11 // pred_check_branch
        %282 = sbr.rel (%p280) target = $region28
      $region27: #{fcomb_forward.1} parent=11 // pred_region
        _
      $region28: #{fcomb_forward.1} parent=11 // pred_fallthru
        _
      // Predicated region
      $region29: #{fcomb_forward.1} parent=11 // pred_check
        %p283 = pneg %p186
      $region30: #{fcomb_forward.1} parent=11 // pred_check_branch
        %285 = sbr.rel (%p283) target = $region32
      $region31: #{fcomb_forward.1} parent=11 // pred_region
        _
      $region32: #{fcomb_forward.1} parent=11 // pred_fallthru
        _
      // Predicated region
      $region33: #{fcomb_forward.1} parent=11 // pred_check
        %p286 = pneg %p207
      $region34: #{fcomb_forward.1} parent=11 // pred_check_branch
        %288 = sbr.rel (%p286) target = $region36
      $region35: #{fcomb_forward.1} parent=11 // pred_region
        _
      $region36: #{fcomb_forward.1} parent=11 // pred_fallthru
        _
      // Predicated region
      $region37: #{fcomb_forward.1} parent=11 // pred_check
        %p289 = pneg %p228
      $region38: #{fcomb_forward.1} parent=11 // pred_check_branch
        %291 = sbr.rel (%p289) target = $region40
      $region39: #{fcomb_forward.1} parent=11 // pred_region
        _
      $region40: #{fcomb_forward.1} parent=11 // pred_fallthru
        _
    $region12: #{fcomb_forward.1} parent=5 // pred_fallthru
      _
    %p292 = scmp.lt.s32.totalorder %s15, 2
    // Predicated region
    $region41: #{fcomb_forward.1} parent=5 // pred_check
      %p293 = pneg %p292
    $region42: #{fcomb_forward.1} parent=5 // pred_check_branch
      %295 = sbr.rel (%p293) target = $region44
    $region43: #{fcomb_forward.1} parent=5 // pred_region
      // Predicated region
      $region45: #{fcomb_forward.1} parent=43 // pred_check
        %p296 = pneg %p49
      $region46: #{fcomb_forward.1} parent=43 // pred_check_branch
        %298 = sbr.rel (%p296) target = $region48
      $region47: #{fcomb_forward.1} parent=43 // pred_region
        %s299 = smul.u32 2, %s23
        %p300 = scmp.lt.s32.totalorder %s22, 1
        %s301 = scalar_select %p300, %s22, 1
        %p302 = scmp.lt.s32.totalorder %s299, 1
        %s303 = scalar_select %p302, %s299, 1
        %s304 = smul.addr %s301, 8
        %s305 = sadd.s32 %s303, %s304
        %s306 = smul.addr %s305, 4
        %s307 = scalar_lea.vmem %s0, %s306
        %s308 = smul.u32 2, %s23
      $region48: #{fcomb_forward.1} parent=43 // pred_fallthru
        _
      // Predicated region
      $region49: #{fcomb_forward.1} parent=43 // pred_check
        %p309 = pneg %p75
      $region50: #{fcomb_forward.1} parent=43 // pred_check_branch
        %311 = sbr.rel (%p309) target = $region52
      $region51: #{fcomb_forward.1} parent=43 // pred_region
        %p312 = scmp.lt.s32.totalorder %s22, 1
        %s313 = scalar_select %p312, %s22, 1
        %s314 = smul.addr %s313, 4
        %s315 = smul.addr %s314, 8
        %s316 = scalar_lea.vmem %s1, %s315
      $region52: #{fcomb_forward.1} parent=43 // pred_fallthru
        _
    $region44: #{fcomb_forward.1} parent=5 // pred_fallthru
      _
    %p317 = scmp.le.s32.totalorder 1, %s15
    %p318 = scmp.lt.s32.totalorder %s15, 3
    %p319 = pnand %p317, %p318
    %p320 = pneg %p319
    // Predicated region
    $region53: #{fcomb_forward.1} parent=5 // pred_check
      _
    $region54: #{fcomb_forward.1} parent=5 // pred_check_branch
      %322 = sbr.rel (%p319) target = $region56
    $region55: #{fcomb_forward.1} parent=5 // pred_region
      %s323 = ssub.s32 %s15, 1
      %s324 = smul.u32 2, %s25
      %p325 = scmp.lt.s32.totalorder %s24, 1
      %s326 = scalar_select %p325, %s24, 1
      %p327 = scmp.lt.s32.totalorder %s324, 1
      %s328 = scalar_select %p327, %s324, 1
      %s329 = smul.addr %s326, 8
      %s330 = sadd.s32 %s328, %s329
      %s331 = smul.addr %s330, 4
      %s332 = scalar_lea.vmem %s0, %s331
      %p333 = pneg %p55
      %p334 = pneg %p52
      %p335 = scmp.lt.s32.totalorder %s24, 1
      %s336 = scalar_select %p335, %s24, 1
      %s337 = smul.addr %s336, 4
      %s338 = smul.addr %s337, 8
      %s339 = scalar_lea.vmem %s1, %s338
      %p340 = pneg %p81
      %p341 = pneg %p78
      %p342 = pneg %p102
      %p343 = pneg %p99
      %p344 = pneg %p123
      %p345 = pneg %p120
      %p346 = pneg %p144
      %p347 = pneg %p141
      %p348 = pneg %p165
      %p349 = pneg %p162
      %p350 = pneg %p186
      %p351 = pneg %p183
      %p352 = pneg %p207
      %p353 = pneg %p204
      %p354 = pneg %p228
      %p355 = pneg %p225
      %p356 = pneg %p256
      %p357 = pneg %p253
      %s358 = smul.u32 2, %s25
      %p359 = scmp.lt.s32.totalorder %s24, 1
      %s360 = scalar_select %p359, %s24, 1
      %p361 = scmp.lt.s32.totalorder %s358, 1
      %s362 = scalar_select %p361, %s358, 1
      %s363 = smul.addr %s360, 2
      %s364 = sadd.s32 %s362, %s363
      %s365 = smul.addr %s364, 8
      %s366 = scalar_lea.vmem %s9, %s365
      %s367 = smul.u32 2, %s25
      %p368 = scmp.lt.s32.totalorder %s24, 1
      %s369 = scalar_select %p368, %s24, 1
      %p370 = scmp.lt.s32.totalorder %s367, 1
      %s371 = scalar_select %p370, %s367, 1
      %s372 = smul.addr %s369, 8
      %s373 = sadd.s32 %s371, %s372
      %s374 = smul.addr %s373, 4
      %s375 = scalar_lea.vmem %s0, %s374
      %s376 = smul.u32 2, %s25
      %p377 = scmp.lt.s32.totalorder %s24, 1
      %s378 = scalar_select %p377, %s24, 1
      %s379 = smul.addr %s378, 4
      %s380 = smul.addr %s379, 8
      %s381 = scalar_lea.vmem %s1, %s380
      %s382 = smul.u32 2, %s25
      %p383 = scmp.lt.s32.totalorder %s24, 1
      %s384 = scalar_select %p383, %s24, 1
      %p385 = scmp.lt.s32.totalorder %s382, 1
      %s386 = scalar_select %p385, %s382, 1
      %s387 = smul.addr %s384, 2
      %s388 = sadd.s32 %s386, %s387
      %s389 = smul.addr %s388, 8
      %s390 = scalar_lea.vmem %s9, %s389
      %s391 = smul.u32 2, %s25
      %v393 = vld [vmem:[%s375] sm:$0xff]
      %v394 = vld [vmem:[%s375 + $0x8] sm:$0xff]
      %v395 = vld [vmem:[%s375 + $0x10] sm:$0xff]
      %v396 = vld [vmem:[%s375 + $0x18] sm:$0xff]
      %v397 = vld [vmem:[%s2] sm:$0xf]
      %v398 = vld [vmem:[%s2 + $0x4] sm:$0xf]
      %v399 = vld [vmem:[%s2 + $0x8] sm:$0xf]
      %v400 = vld [vmem:[%s2 + $0xc] sm:$0xf]
      %v401 = vld [vmem:[%s381] sm:$0xff]
      %v402 = vld [vmem:[%s381 + $0x8] sm:$0xff]
      %v403 = vld [vmem:[%s381 + $0x10] sm:$0xff]
      %v404 = vld [vmem:[%s381 + $0x18] sm:$0xff]
      %406 = vset.pattern.permute.xlu0 0
      %407 = vperm.xlu0 %406, %v401
      %v408 = vpop.permute.xlu0 %407
      %411 = vset.pattern.permute.xlu0 0
      %412 = vperm.xlu0 %411, %v402
      %v413 = vpop.permute.xlu0 %412
      %416 = vset.pattern.permute.xlu0 0
      %417 = vperm.xlu0 %416, %v403
      %v418 = vpop.permute.xlu0 %417
      %421 = vset.pattern.permute.xlu0 0
      %422 = vperm.xlu0 %421, %v404
      %v423 = vpop.permute.xlu0 %422
      %v429 = vunpack.c.l.b16 %v397
      %v430 = vunpack.c.l.b16 %v398
      %v431 = vunpack.c.l.b16 %v399
      %v432 = vunpack.c.l.b16 %v400
      %v433 = vpack.c.b16 %v430, %v429
      %v434 = vpack.c.b16 %v432, %v431
      %v439 = vunpack.c.l.b16 %v393
      %v440 = vunpack.c.h.b16 %v393
      %v441 = vunpack.c.l.b16 %v394
      %v442 = vunpack.c.h.b16 %v394
      %v443 = vunpack.c.l.b16 %v395
      %v444 = vunpack.c.h.b16 %v395
      %v445 = vunpack.c.l.b16 %v396
      %v446 = vunpack.c.h.b16 %v396
      %v447 = vpack.c.b16 %v441, %v439
      %v448 = vpack.c.b16 %v442, %v440
      %v449 = vpack.c.b16 %v445, %v443
      %v450 = vpack.c.b16 %v446, %v444
      %vm455 = vcmask 261120
      %v457 = vsel %vm455, %v433, 0
      %v460 = vsel %vm455, %v434, 0
      %462 = vmatprep.subr.bf16.mxu0 %v448
      %463 = vmatpush1.bf16.msra.mxu0 %v447
      %464 = vmatprep.subr.bf16.mxu0 %v450
      %465 = vmatpush1.bf16.msra.mxu0 %v449
      %466 = vmatprep.subr.bf16.mxu0 0
      %467 = vmatpush1.bf16.msra.mxu0 0
      %468 = vmatprep.subr.bf16.mxu0 0
      %469 = vmatpush1.bf16.msra.mxu0 0
      %470 = vmatprep.subr.bf16.mxu0 0
      %471 = vmatpush1.bf16.msra.mxu0 0
      %472 = vmatprep.subr.bf16.mxu0 0
      %473 = vmatpush1.bf16.msra.mxu0 0
      %474 = vmatprep.subr.bf16.mxu0 0
      %475 = vmatpush1.bf16.msra.mxu0 0
      %476 = vmatprep.subr.bf16.mxu0 0
      %477 = vmatpush1.bf16.msra.mxu0 0
      %478 = vmatprep.subr.bf16.mxu0 0
      %479 = vmatpush1.bf16.msra.mxu0 0
      %480 = vmatprep.subr.bf16.mxu0 0
      %481 = vmatpush1.bf16.msra.mxu0 0
      %482 = vmatprep.subr.bf16.mxu0 0
      %483 = vmatpush1.bf16.msra.mxu0 0
      %484 = vmatprep.subr.bf16.mxu0 0
      %485 = vmatpush1.bf16.msra.mxu0 0
      %486 = vmatprep.subr.bf16.mxu0 0
      %487 = vmatpush1.bf16.msra.mxu0 0
      %488 = vmatprep.subr.bf16.mxu0 0
      %489 = vmatpush1.bf16.msra.mxu0 0
      %490 = vmatprep.subr.bf16.mxu0 0
      %491 = vmatpush1.bf16.msra.mxu0 0
      %492 = vmatprep.subr.bf16.mxu0 0
      %493 = vmatpush1.bf16.msra.mxu0 0
      %494 = vmatprep.mubr.bf16.mxu0 0
      %495 = vmatmul.mubr.bf16.gmra.mrb[0].mxu0 %v457
      %v496 = vpop.f32.mrb[0].mxu0
      %v497 = vadd.f32 %v408, %v496
      %v498 = vpop.f32.mrb[0].mxu0
      %v499 = vadd.f32 %v408, %v498
      %v500 = vpop.f32.mrb[0].mxu0
      %v501 = vadd.f32 %v413, %v500
      %v502 = vpop.f32.mrb[0].mxu0
      %v503 = vadd.f32 %v413, %v502
      %504 = vmatprep.mubr.bf16.mxu0 0
      %505 = vmatmul.mubr.bf16.gmra.mrb[0].mxu0 %v460
      %v506 = vpop.f32.mrb[0].mxu0
      %v507 = vadd.f32 %v418, %v506
      %v508 = vpop.f32.mrb[0].mxu0
      %v509 = vadd.f32 %v418, %v508
      %v510 = vpop.f32.mrb[0].mxu0
      %v511 = vadd.f32 %v423, %v510
      %v512 = vpop.f32.mrb[0].mxu0
      %v513 = vadd.f32 %v423, %v512
      %514 = vdwg.mxu0
      %v515 = vmax.f32 %v497, 0.0
      %v516 = vmax.f32 %v499, 0.0
      %v517 = vmax.f32 %v501, 0.0
      %v518 = vmax.f32 %v503, 0.0
      %v519 = vmax.f32 %v507, 0.0
      %v520 = vmax.f32 %v509, 0.0
      %v521 = vmax.f32 %v511, 0.0
      %v522 = vmax.f32 %v513, 0.0
      %v523 = vld [vmem:[%s3] sm:$0xf]
      %v524 = vld [vmem:[%s3 + $0x4] sm:$0xf]
      %v525 = vld [vmem:[%s3 + $0x8] sm:$0xf]
      %v526 = vld [vmem:[%s3 + $0xc] sm:$0xf]
      %v527 = vld [vmem:[%s4] sm:$0xff]
      %v528 = vld [vmem:[%s4 + $0x8] sm:$0xff]
      %v529 = vld [vmem:[%s4 + $0x10] sm:$0xff]
      %v530 = vld [vmem:[%s4 + $0x18] sm:$0xff]
      %v531 = vpack.c.bf16 %v517, %v515
      %v532 = vpack.c.bf16 %v518, %v516
      %v533 = vpack.c.bf16 %v521, %v519
      %v534 = vpack.c.bf16 %v522, %v520
      %536 = vset.pattern.permute.xlu0 0
      %537 = vperm.xlu0 %536, %v527
      %v538 = vpop.permute.xlu0 %537
      %541 = vset.pattern.permute.xlu0 0
      %542 = vperm.xlu0 %541, %v528
      %v543 = vpop.permute.xlu0 %542
      %546 = vset.pattern.permute.xlu0 0
      %547 = vperm.xlu0 %546, %v529
      %v548 = vpop.permute.xlu0 %547
      %551 = vset.pattern.permute.xlu0 0
      %552 = vperm.xlu0 %551, %v530
      %v553 = vpop.permute.xlu0 %552
      %v559 = vunpack.c.l.b16 %v523
      %v560 = vunpack.c.l.b16 %v524
      %v561 = vunpack.c.l.b16 %v525
      %v562 = vunpack.c.l.b16 %v526
      %v563 = vpack.c.b16 %v560, %v559
      %v564 = vpack.c.b16 %v562, %v561
      %v566 = vsel %vm455, %v563, 0
      %v569 = vsel %vm455, %v564, 0
      %571 = vmatprep.subr.bf16.mxu0 %v532
      %572 = vmatpush1.bf16.msra.mxu0 %v531
      %573 = vmatprep.subr.bf16.mxu0 %v534
      %574 = vmatpush1.bf16.msra.mxu0 %v533
      %575 = vmatprep.subr.bf16.mxu0 0
      %576 = vmatpush1.bf16.msra.mxu0 0
      %577 = vmatprep.subr.bf16.mxu0 0
      %578 = vmatpush1.bf16.msra.mxu0 0
      %579 = vmatprep.subr.bf16.mxu0 0
      %580 = vmatpush1.bf16.msra.mxu0 0
      %581 = vmatprep.subr.bf16.mxu0 0
      %582 = vmatpush1.bf16.msra.mxu0 0
      %583 = vmatprep.subr.bf16.mxu0 0
      %584 = vmatpush1.bf16.msra.mxu0 0
      %585 = vmatprep.subr.bf16.mxu0 0
      %586 = vmatpush1.bf16.msra.mxu0 0
      %587 = vmatprep.subr.bf16.mxu0 0
      %588 = vmatpush1.bf16.msra.mxu0 0
      %589 = vmatprep.subr.bf16.mxu0 0
      %590 = vmatpush1.bf16.msra.mxu0 0
      %591 = vmatprep.subr.bf16.mxu0 0
      %592 = vmatpush1.bf16.msra.mxu0 0
      %593 = vmatprep.subr.bf16.mxu0 0
      %594 = vmatpush1.bf16.msra.mxu0 0
      %595 = vmatprep.subr.bf16.mxu0 0
      %596 = vmatpush1.bf16.msra.mxu0 0
      %597 = vmatprep.subr.bf16.mxu0 0
      %598 = vmatpush1.bf16.msra.mxu0 0
      %599 = vmatprep.subr.bf16.mxu0 0
      %600 = vmatpush1.bf16.msra.mxu0 0
      %601 = vmatprep.subr.bf16.mxu0 0
      %602 = vmatpush1.bf16.msra.mxu0 0
      %603 = vmatprep.mubr.bf16.mxu0 0
      %604 = vmatmul.mubr.bf16.gmra.mrb[0].mxu0 %v566
      %v605 = vpop.f32.mrb[0].mxu0
      %v606 = vadd.f32 %v538, %v605
      %v607 = vpop.f32.mrb[0].mxu0
      %v608 = vadd.f32 %v538, %v607
      %v609 = vpop.f32.mrb[0].mxu0
      %v610 = vadd.f32 %v543, %v609
      %v611 = vpop.f32.mrb[0].mxu0
      %v612 = vadd.f32 %v543, %v611
      %613 = vmatprep.mubr.bf16.mxu0 0
      %614 = vmatmul.mubr.bf16.gmra.mrb[0].mxu0 %v569
      %v615 = vpop.f32.mrb[0].mxu0
      %v616 = vadd.f32 %v548, %v615
      %v617 = vpop.f32.mrb[0].mxu0
      %v618 = vadd.f32 %v548, %v617
      %v619 = vpop.f32.mrb[0].mxu0
      %v620 = vadd.f32 %v553, %v619
      %v621 = vpop.f32.mrb[0].mxu0
      %v622 = vadd.f32 %v553, %v621
      %623 = vdwg.mxu0
      %v624 = vmax.f32 %v606, 0.0
      %v625 = vmax.f32 %v608, 0.0
      %v626 = vmax.f32 %v610, 0.0
      %v627 = vmax.f32 %v612, 0.0
      %v628 = vmax.f32 %v616, 0.0
      %v629 = vmax.f32 %v618, 0.0
      %v630 = vmax.f32 %v620, 0.0
      %v631 = vmax.f32 %v622, 0.0
      %v632 = vld [vmem:[%s5] sm:$0xf]
      %v633 = vld [vmem:[%s5 + $0x4] sm:$0xf]
      %v634 = vld [vmem:[%s5 + $0x8] sm:$0xf]
      %v635 = vld [vmem:[%s5 + $0xc] sm:$0xf]
      %v636 = vld [vmem:[%s6] sm:$0xff]
      %v637 = vld [vmem:[%s6 + $0x8] sm:$0xff]
      %v638 = vld [vmem:[%s6 + $0x10] sm:$0xff]
      %v639 = vld [vmem:[%s6 + $0x18] sm:$0xff]
      %v640 = vpack.c.bf16 %v626, %v624
      %v641 = vpack.c.bf16 %v627, %v625
      %v642 = vpack.c.bf16 %v630, %v628
      %v643 = vpack.c.bf16 %v631, %v629
      %645 = vset.pattern.permute.xlu0 0
      %646 = vperm.xlu0 %645, %v636
      %v647 = vpop.permute.xlu0 %646
      %650 = vset.pattern.permute.xlu0 0
      %651 = vperm.xlu0 %650, %v637
      %v652 = vpop.permute.xlu0 %651
      %655 = vset.pattern.permute.xlu0 0
      %656 = vperm.xlu0 %655, %v638
      %v657 = vpop.permute.xlu0 %656
      %660 = vset.pattern.permute.xlu0 0
      %661 = vperm.xlu0 %660, %v639
      %v662 = vpop.permute.xlu0 %661
      %v668 = vunpack.c.l.b16 %v632
      %v669 = vunpack.c.l.b16 %v633
      %v670 = vunpack.c.l.b16 %v634
      %v671 = vunpack.c.l.b16 %v635
      %v672 = vpack.c.b16 %v669, %v668
      %v673 = vpack.c.b16 %v671, %v670
      %v675 = vsel %vm455, %v672, 0
      %v678 = vsel %vm455, %v673, 0
      %680 = vmatprep.subr.bf16.mxu0 %v641
      %681 = vmatpush1.bf16.msra.mxu0 %v640
      %682 = vmatprep.subr.bf16.mxu0 %v643
      %683 = vmatpush1.bf16.msra.mxu0 %v642
      %684 = vmatprep.subr.bf16.mxu0 0
      %685 = vmatpush1.bf16.msra.mxu0 0
      %686 = vmatprep.subr.bf16.mxu0 0
      %687 = vmatpush1.bf16.msra.mxu0 0
      %688 = vmatprep.subr.bf16.mxu0 0
      %689 = vmatpush1.bf16.msra.mxu0 0
      %690 = vmatprep.subr.bf16.mxu0 0
      %691 = vmatpush1.bf16.msra.mxu0 0
      %692 = vmatprep.subr.bf16.mxu0 0
      %693 = vmatpush1.bf16.msra.mxu0 0
      %694 = vmatprep.subr.bf16.mxu0 0
      %695 = vmatpush1.bf16.msra.mxu0 0
      %696 = vmatprep.subr.bf16.mxu0 0
      %697 = vmatpush1.bf16.msra.mxu0 0
      %698 = vmatprep.subr.bf16.mxu0 0
      %699 = vmatpush1.bf16.msra.mxu0 0
      %700 = vmatprep.subr.bf16.mxu0 0
      %701 = vmatpush1.bf16.msra.mxu0 0
      %702 = vmatprep.subr.bf16.mxu0 0
      %703 = vmatpush1.bf16.msra.mxu0 0
      %704 = vmatprep.subr.bf16.mxu0 0
      %705 = vmatpush1.bf16.msra.mxu0 0
      %706 = vmatprep.subr.bf16.mxu0 0
      %707 = vmatpush1.bf16.msra.mxu0 0
      %708 = vmatprep.subr.bf16.mxu0 0
      %709 = vmatpush1.bf16.msra.mxu0 0
      %710 = vmatprep.subr.bf16.mxu0 0
      %711 = vmatpush1.bf16.msra.mxu0 0
      %712 = vmatprep.mubr.bf16.mxu0 0
      %713 = vmatmul.mubr.bf16.gmra.mrb[0].mxu0 %v675
      %v714 = vpop.f32.mrb[0].mxu0
      %v715 = vadd.f32 %v647, %v714
      %v716 = vpop.f32.mrb[0].mxu0
      %v717 = vadd.f32 %v647, %v716
      %v718 = vpop.f32.mrb[0].mxu0
      %v719 = vadd.f32 %v652, %v718
      %v720 = vpop.f32.mrb[0].mxu0
      %v721 = vadd.f32 %v652, %v720
      %722 = vmatprep.mubr.bf16.mxu0 0
      %723 = vmatmul.mubr.bf16.gmra.mrb[0].mxu0 %v678
      %v724 = vpop.f32.mrb[0].mxu0
      %v725 = vadd.f32 %v657, %v724
      %v726 = vpop.f32.mrb[0].mxu0
      %v727 = vadd.f32 %v657, %v726
      %v728 = vpop.f32.mrb[0].mxu0
      %v729 = vadd.f32 %v662, %v728
      %v730 = vpop.f32.mrb[0].mxu0
      %v731 = vadd.f32 %v662, %v730
      %732 = vdwg.mxu0
      %v733 = vmax.f32 %v715, 0.0
      %v734 = vmax.f32 %v717, 0.0
      %v735 = vmax.f32 %v719, 0.0
      %v736 = vmax.f32 %v721, 0.0
      %v737 = vmax.f32 %v725, 0.0
      %v738 = vmax.f32 %v727, 0.0
      %v739 = vmax.f32 %v729, 0.0
      %v740 = vmax.f32 %v731, 0.0
      %v741 = vld [vmem:[%s7] sm:$0xf]
      %v742 = vld [vmem:[%s8] sm:$0xff]
      %v743 = vpack.c.bf16 %v735, %v733
      %v744 = vpack.c.bf16 %v736, %v734
      %v745 = vpack.c.bf16 %v739, %v737
      %v746 = vpack.c.bf16 %v740, %v738
      %748 = vset.pattern.permute.xlu0 0
      %749 = vperm.xlu0 %748, %v742
      %v750 = vpop.permute.xlu0 %749
      %v753 = vsel %vm455, %v741, 0
      %755 = vmatprep.subr.bf16.mxu0 %v744
      %756 = vmatpush1.bf16.msra.mxu0 %v743
      %757 = vmatprep.subr.bf16.mxu0 %v746
      %758 = vmatpush1.bf16.msra.mxu0 %v745
      %759 = vmatprep.subr.bf16.mxu0 0
      %760 = vmatpush1.bf16.msra.mxu0 0
      %761 = vmatprep.subr.bf16.mxu0 0
      %762 = vmatpush1.bf16.msra.mxu0 0
      %763 = vmatprep.subr.bf16.mxu0 0
      %764 = vmatpush1.bf16.msra.mxu0 0
      %765 = vmatprep.subr.bf16.mxu0 0
      %766 = vmatpush1.bf16.msra.mxu0 0
      %767 = vmatprep.subr.bf16.mxu0 0
      %768 = vmatpush1.bf16.msra.mxu0 0
      %769 = vmatprep.subr.bf16.mxu0 0
      %770 = vmatpush1.bf16.msra.mxu0 0
      %771 = vmatprep.subr.bf16.mxu0 0
      %772 = vmatpush1.bf16.msra.mxu0 0
      %773 = vmatprep.subr.bf16.mxu0 0
      %774 = vmatpush1.bf16.msra.mxu0 0
      %775 = vmatprep.subr.bf16.mxu0 0
      %776 = vmatpush1.bf16.msra.mxu0 0
      %777 = vmatprep.subr.bf16.mxu0 0
      %778 = vmatpush1.bf16.msra.mxu0 0
      %779 = vmatprep.subr.bf16.mxu0 0
      %780 = vmatpush1.bf16.msra.mxu0 0
      %781 = vmatprep.subr.bf16.mxu0 0
      %782 = vmatpush1.bf16.msra.mxu0 0
      %783 = vmatprep.subr.bf16.mxu0 0
      %784 = vmatpush1.bf16.msra.mxu0 0
      %785 = vmatprep.subr.bf16.mxu0 0
      %786 = vmatpush1.bf16.msra.mxu0 0
      %787 = vmatprep.mubr.bf16.mxu0 0
      %788 = vmatmul.mubr.bf16.gmra.mrb[0].mxu0 %v753
      %v789 = vpop.f32.mrb[0].mxu0
      %v790 = vadd.f32 %v750, %v789
      %v791 = vpop.f32.mrb[0].mxu0
      %v792 = vadd.f32 %v750, %v791
      %v793 = vpop.f32.mrb[0].mxu0
      %v794 = vpop.f32.mrb[0].mxu0
      %795 = vdwg.mxu0
      %796 = vst [vmem:[%s390] sm:$0xff] %v790
      %797 = vst [vmem:[%s390 + $0x8] sm:$0xff] %v792
      %s798 = smul.u32 2, %s25
      %p799 = scmp.lt.s32.totalorder %s24, 1
      %s800 = scalar_select %p799, %s24, 1
      %p801 = scmp.lt.s32.totalorder %s798, 1
      %s802 = scalar_select %p801, %s798, 1
      %s803 = smul.addr %s800, 2
      %s804 = sadd.s32 %s802, %s803
      %s805 = smul.addr %s804, 8
      %s806 = scalar_lea.vmem %s9, %s805
      // Predicated region
      $region57: #{fcomb_forward.1} parent=55 // pred_check
        %p807 = pneg %p253
      $region58: #{fcomb_forward.1} parent=55 // pred_check_branch
        %809 = sbr.rel (%p807) target = $region60
      $region59: #{fcomb_forward.1} parent=55 // pred_region
        %s810 = smul.u32 2, %s25
      $region60: #{fcomb_forward.1} parent=55 // pred_fallthru
        _
    $region56: #{fcomb_forward.1} parent=5 // pred_fallthru
      _
    %p811 = scmp.le.s32.totalorder 2, %s15
    // Predicated region
    $region61: #{fcomb_forward.1} parent=5 // pred_check
      %p812 = pneg %p811
    $region62: #{fcomb_forward.1} parent=5 // pred_check_branch
      %814 = sbr.rel (%p812) target = $region64
    $region63: #{fcomb_forward.1} parent=5 // pred_region
      %s815 = ssub.s32 %s15, 2
      // Predicated region
      $region65: #{fcomb_forward.1} parent=63 // pred_check
        %p816 = pneg %p259
      $region66: #{fcomb_forward.1} parent=63 // pred_check_branch
        %818 = sbr.rel (%p816) target = $region68
      $region67: #{fcomb_forward.1} parent=63 // pred_region
        %s819 = smul.u32 2, %s27
        %p820 = scmp.lt.s32.totalorder %s26, 1
        %s821 = scalar_select %p820, %s26, 1
        %p822 = scmp.lt.s32.totalorder %s819, 1
        %s823 = scalar_select %p822, %s819, 1
        %s824 = smul.addr %s821, 2
        %s825 = sadd.s32 %s823, %s824
        %s826 = smul.addr %s825, 8
        %s827 = scalar_lea.vmem %s9, %s826
      $region68: #{fcomb_forward.1} parent=63 // pred_fallthru
        _
    $region64: #{fcomb_forward.1} parent=5 // pred_fallthru
      _
  $region6: #{fcomb_forward.1} parent=0 // loop_footer
    %s19 = sadd.s32 1, %s15
  $region7: #{fcomb_forward.1} parent=0 // loop_footer_branch
    %14 = sbr.rel target = $region3
  $region8: #{fcomb_forward.1} parent=0 // loop_exit
    _

</llo_original>
